<compile_context>
chip_gen: v7x
topology: tpu7x:2x2x1
jax: 0.10.0
libtpu: 0.0.40
codegen_flags: <defaults>
</compile_context>

<pallas_src>
import math

import jax
import jax.numpy as jnp
from jax.experimental import pallas as pl
from jax.experimental.pallas import tpu as pltpu


def _round_up(x: int, m: int) -> int:
    return ((x + m - 1) // m) * m


def _make_actor_kernel(action_clip: float):
    def kernel(s_ref, a_ref,
               w1s_ref, w1a_ref, b1_ref,
               w2_ref, b2_ref,
               w3_ref, b3_ref,
               w4_ref, b4_ref,
               o_ref):
        # Layer 1: cat([state, action], 1) @ W1 == state @ W1[:S] + action @ W1[S:]
        s = s_ref[...].astype(jnp.bfloat16)
        a = a_ref[...].astype(jnp.bfloat16)
        h = (jnp.dot(s, w1s_ref[...], preferred_element_type=jnp.float32)
             + jnp.dot(a, w1a_ref[...], preferred_element_type=jnp.float32)
             + b1_ref[...])
        h = jnp.maximum(h, 0.0)
        # Layer 2
        h = jnp.dot(h.astype(jnp.bfloat16), w2_ref[...],
                    preferred_element_type=jnp.float32) + b2_ref[...]
        h = jnp.maximum(h, 0.0)
        # Layer 3
        h = jnp.dot(h.astype(jnp.bfloat16), w3_ref[...],
                    preferred_element_type=jnp.float32) + b3_ref[...]
        h = jnp.maximum(h, 0.0)
        # Layer 4 + tanh clip (bias/tanh in f32 on VPU/EUP)
        z = jnp.dot(h.astype(jnp.bfloat16), w4_ref[...],
                    preferred_element_type=jnp.float32) + b4_ref[...]
        o_ref[...] = (action_clip * jnp.tanh(z)).astype(o_ref.dtype)

    return kernel


def bcq_actor_forward(state, action, params, *, action_clip=1.0, tile_b=512):
    """Fused BCQ_Actor forward.

    state:  [B, state_dim]  float32
    action: [B, action_dim] float32
    params: dict with w1..w4 (stored [in_features, out_features]) and
            b1..b4 (stored [1, out_features]), all float32.
    returns [B, action_dim] float32
    """
    B, state_dim = state.shape
    action_dim = action.shape[1]
    hidden_dim = params["w2"].shape[0]
    out_dim = params["w4"].shape[1]

    # --- host-side weight prep (cheap XLA ops; hoist/jit at the call-site if
    # this is called repeatedly with the same params) ---------------------
    # TODO(synk): for small-batch RL rollouts, keep w1..w4 resident in VMEM
    # across invocations (cross-call prefetch / single pallas_call over a step
    # grid) instead of re-DMAing them every forward.
    out_pad = _round_up(max(out_dim, 1), 128)          # lane-dense output
    w1 = params["w1"].astype(jnp.bfloat16)
    w1s, w1a = w1[:state_dim], w1[state_dim:]           # split -> no concat
    w2 = params["w2"].astype(jnp.bfloat16)
    w3 = params["w3"].astype(jnp.bfloat16)
    w4 = jnp.zeros((hidden_dim, out_pad), jnp.bfloat16)
    w4 = w4.at[:, :out_dim].set(params["w4"].astype(jnp.bfloat16))
    b1 = params["b1"].astype(jnp.float32)
    b2 = params["b2"].astype(jnp.float32)
    b3 = params["b3"].astype(jnp.float32)
    b4 = jnp.zeros((1, out_pad), jnp.float32)
    b4 = b4.at[:, :out_dim].set(params["b4"].astype(jnp.float32))

    # --- batch tiling: largest multiple-of-8 tile <= tile_b; pad B to a tile
    # multiple so every grid step sees a full block. -----------------------
    tb = min(_round_up(B, 8), _round_up(tile_b, 8))
    b_pad = _round_up(B, tb)
    sp = state.astype(jnp.float32)
    ap = action.astype(jnp.float32)
    if b_pad != B:
        sp = jnp.pad(sp, ((0, b_pad - B), (0, 0)))
        ap = jnp.pad(ap, ((0, b_pad - B), (0, 0)))

    grid = (b_pad // tb,)

    def resident(arr):
        # Full-array block, constant block index -> fetched once, stays in VMEM.
        return pl.BlockSpec(arr.shape, lambda i: (0, 0))

    out = pl.pallas_call(
        _make_actor_kernel(float(action_clip)),
        out_shape=jax.ShapeDtypeStruct((b_pad, out_pad), jnp.float32),
        grid=grid,
        in_specs=[
            pl.BlockSpec((tb, state_dim), lambda i: (i, 0)),
            pl.BlockSpec((tb, action_dim), lambda i: (i, 0)),
            resident(w1s), resident(w1a), resident(b1),
            resident(w2), resident(b2),
            resident(w3), resident(b3),
            resident(w4), resident(b4),
        ],
        out_specs=pl.BlockSpec((tb, out_pad), lambda i: (i, 0)),
        compiler_params=pltpu.CompilerParams(
            dimension_semantics=("parallel",),       # megacore sharding on v7x
            vmem_limit_bytes=32 * 1024 * 1024,        # explicit; safe on 64 MiB v7x
        ),
    )(sp, ap, w1s, w1a, b1, w2, b2, w3, b3, w4, b4)

    return out[:B, :out_dim]


def init_bcq_actor_params(key, state_dim, action_dim, hidden_dim=256):
    """Deterministic init mirroring nn.Linear default (uniform +/- 1/sqrt(fan_in)).

    Weights are stored transposed: [in_features, out_features].
    Biases are stored as [1, out_features].
    """
    dims = [
        (state_dim + action_dim, hidden_dim),  # l1
        (hidden_dim, hidden_dim),              # l2
        (hidden_dim, hidden_dim),              # l3
        (hidden_dim, action_dim),              # l4
    ]
    params = {}
    for i, (fan_in, fan_out) in enumerate(dims, start=1):
        key, kw, kb = jax.random.split(key, 3)
        bound = 1.0 / math.sqrt(fan_in)
        params[f"w{i}"] = jax.random.uniform(
            kw, (fan_in, fan_out), jnp.float32, minval=-bound, maxval=bound)
        params[f"b{i}"] = jax.random.uniform(
            kb, (1, fan_out), jnp.float32, minval=-bound, maxval=bound)
    return params


def bcq_actor_reference_f32(state, action, params, *, action_clip=1.0):
    """Pure-JAX full-f32 reference (matches the PyTorch module)."""
    x = jnp.concatenate([state, action], axis=1).astype(jnp.float32)
    h = jax.nn.relu(x @ params["w1"] + params["b1"])
    h = jax.nn.relu(h @ params["w2"] + params["b2"])
    h = jax.nn.relu(h @ params["w3"] + params["b3"])
    return action_clip * jnp.tanh(h @ params["w4"] + params["b4"])


def bcq_actor_reference_bf16(state, action, params, *, action_clip=1.0):
    """Reference with the same bf16-dot / f32-accumulate structure as the kernel."""
    bf16, f32 = jnp.bfloat16, jnp.float32
    sd = state.shape[1]

    def dot(a, b):
        return jnp.dot(a.astype(bf16), b.astype(bf16), preferred_element_type=f32)

    h = jax.nn.relu(dot(state, params["w1"][:sd]) + dot(action, params["w1"][sd:])
                    + params["b1"])
    h = jax.nn.relu(dot(h, params["w2"]) + params["b2"])
    h = jax.nn.relu(dot(h, params["w3"]) + params["b3"])
    return action_clip * jnp.tanh(dot(h, params["w4"]) + params["b4"])


if __name__ == "__main__":
    # Small shapes consistent with the module's forward:
    batch, state_dim, action_dim, hidden_dim = 8, 17, 6, 32
    action_clip = 1.0

    key = jax.random.PRNGKey(0)
    key, ks, ka, kp = jax.random.split(key, 4)
    state = jax.random.normal(ks, (batch, state_dim), jnp.float32)
    action = jax.random.normal(ka, (batch, action_dim), jnp.float32)
    params = init_bcq_actor_params(kp, state_dim, action_dim, hidden_dim)

    out = bcq_actor_forward(state, action, params, action_clip=action_clip)
    out = jax.block_until_ready(out)

    assert out.shape == (batch, action_dim)
    ref_bf16 = bcq_actor_reference_bf16(state, action, params, action_clip=action_clip)
    ref_f32 = bcq_actor_reference_f32(state, action, params, action_clip=action_clip)
    assert jnp.allclose(out, ref_bf16, atol=5e-3, rtol=5e-3), "mismatch vs bf16 reference"
    assert jnp.allclose(out, ref_f32, atol=5e-2, rtol=5e-2), "mismatch vs f32 reference"

    print("KERNEL_OK")
</pallas_src>

<mosaic_0001>
module attributes {stable_mosaic.version = 11 : i64} {
  func.func @kernel(%arg0: i32, %arg1: memref<8x17xf32, #tpu.memory_space<vmem>>, %arg2: memref<8x6xf32, #tpu.memory_space<vmem>>, %arg3: memref<17x32xbf16, #tpu.memory_space<vmem>>, %arg4: memref<6x32xbf16, #tpu.memory_space<vmem>>, %arg5: memref<1x32xf32, #tpu.memory_space<vmem>>, %arg6: memref<32x32xbf16, #tpu.memory_space<vmem>>, %arg7: memref<1x32xf32, #tpu.memory_space<vmem>>, %arg8: memref<32x32xbf16, #tpu.memory_space<vmem>>, %arg9: memref<1x32xf32, #tpu.memory_space<vmem>>, %arg10: memref<32x128xbf16, #tpu.memory_space<vmem>>, %arg11: memref<1x128xf32, #tpu.memory_space<vmem>>, %arg12: memref<8x128xf32, #tpu.memory_space<vmem>>) attributes {dimension_semantics = [#tpu.dimension_semantics<parallel>], iteration_bounds = array<i64: 1>, scalar_prefetch = 0 : i64, scratch_operands = 0 : i64, tpu.core_type = #tpu.core_type<tc>, window_params = [{transform_indices = @transform_0, window_bounds = array<i64: 8, 17>}, {transform_indices = @transform_1, window_bounds = array<i64: 8, 6>}, {pipeline_mode = #tpu.pipeline_mode<synchronous>, transform_indices = @transform_2, window_bounds = array<i64: 17, 32>}, {pipeline_mode = #tpu.pipeline_mode<synchronous>, transform_indices = @transform_3, window_bounds = array<i64: 6, 32>}, {pipeline_mode = #tpu.pipeline_mode<synchronous>, transform_indices = @transform_4, window_bounds = array<i64: 1, 32>}, {pipeline_mode = #tpu.pipeline_mode<synchronous>, transform_indices = @transform_5, window_bounds = array<i64: 32, 32>}, {pipeline_mode = #tpu.pipeline_mode<synchronous>, transform_indices = @transform_6, window_bounds = array<i64: 1, 32>}, {pipeline_mode = #tpu.pipeline_mode<synchronous>, transform_indices = @transform_7, window_bounds = array<i64: 32, 32>}, {pipeline_mode = #tpu.pipeline_mode<synchronous>, transform_indices = @transform_8, window_bounds = array<i64: 1, 32>}, {pipeline_mode = #tpu.pipeline_mode<synchronous>, transform_indices = @transform_9, window_bounds = array<i64: 32, 128>}, {pipeline_mode = #tpu.pipeline_mode<synchronous>, transform_indices = @transform_10, window_bounds = array<i64: 1, 128>}, {transform_indices = @transform_11, window_bounds = array<i64: 8, 128>}]} {
    %c0 = arith.constant 0 : index
    %c0_0 = arith.constant 0 : index
    %0 = vector.load %arg1[%c0, %c0_0] : memref<8x17xf32, #tpu.memory_space<vmem>>, vector<8x17xf32>
    %1 = arith.truncf %0 : vector<8x17xf32> to vector<8x17xbf16>
    %c0_1 = arith.constant 0 : index
    %c0_2 = arith.constant 0 : index
    %2 = vector.load %arg2[%c0_1, %c0_2] : memref<8x6xf32, #tpu.memory_space<vmem>>, vector<8x6xf32>
    %3 = arith.truncf %2 : vector<8x6xf32> to vector<8x6xbf16>
    %c0_3 = arith.constant 0 : index
    %c0_4 = arith.constant 0 : index
    %4 = vector.load %arg3[%c0_3, %c0_4] : memref<17x32xbf16, #tpu.memory_space<vmem>>, vector<17x32xbf16>
    %cst = arith.constant dense<0.000000e+00> : vector<8x32xf32>
    %5 = tpu.matmul %1, %4, %cst {dimension_numbers = #tpu.dot_dimension_numbers<[1], [0], [0], [1], [0, 0, 1, 1], [], []>} : vector<8x17xbf16>, vector<17x32xbf16>, vector<8x32xf32> -> vector<8x32xf32>
    %c0_5 = arith.constant 0 : index
    %c0_6 = arith.constant 0 : index
    %6 = vector.load %arg4[%c0_5, %c0_6] : memref<6x32xbf16, #tpu.memory_space<vmem>>, vector<6x32xbf16>
    %cst_7 = arith.constant dense<0.000000e+00> : vector<8x32xf32>
    %7 = tpu.matmul %3, %6, %cst_7 {dimension_numbers = #tpu.dot_dimension_numbers<[1], [0], [0], [1], [0, 0, 1, 1], [], []>} : vector<8x6xbf16>, vector<6x32xbf16>, vector<8x32xf32> -> vector<8x32xf32>
    %8 = arith.addf %5, %7 : vector<8x32xf32>
    %c0_8 = arith.constant 0 : index
    %c0_9 = arith.constant 0 : index
    %9 = vector.load %arg5[%c0_8, %c0_9] : memref<1x32xf32, #tpu.memory_space<vmem>>, vector<1x32xf32>
    %10 = vector.broadcast %9 : vector<1x32xf32> to vector<8x32xf32>
    %11 = arith.addf %8, %10 : vector<8x32xf32>
    %cst_10 = arith.constant 0.000000e+00 : f32
    %12 = vector.broadcast %cst_10 : f32 to vector<8x32xf32>
    %13 = arith.maximumf %11, %12 : vector<8x32xf32>
    %14 = arith.truncf %13 : vector<8x32xf32> to vector<8x32xbf16>
    %c0_11 = arith.constant 0 : index
    %c0_12 = arith.constant 0 : index
    %15 = vector.load %arg6[%c0_11, %c0_12] : memref<32x32xbf16, #tpu.memory_space<vmem>>, vector<32x32xbf16>
    %cst_13 = arith.constant dense<0.000000e+00> : vector<8x32xf32>
    %16 = tpu.matmul %14, %15, %cst_13 {dimension_numbers = #tpu.dot_dimension_numbers<[1], [0], [0], [1], [0, 0, 1, 1], [], []>} : vector<8x32xbf16>, vector<32x32xbf16>, vector<8x32xf32> -> vector<8x32xf32>
    %c0_14 = arith.constant 0 : index
    %c0_15 = arith.constant 0 : index
    %17 = vector.load %arg7[%c0_14, %c0_15] : memref<1x32xf32, #tpu.memory_space<vmem>>, vector<1x32xf32>
    %18 = vector.broadcast %17 : vector<1x32xf32> to vector<8x32xf32>
    %19 = arith.addf %16, %18 : vector<8x32xf32>
    %cst_16 = arith.constant 0.000000e+00 : f32
    %20 = vector.broadcast %cst_16 : f32 to vector<8x32xf32>
    %21 = arith.maximumf %19, %20 : vector<8x32xf32>
    %22 = arith.truncf %21 : vector<8x32xf32> to vector<8x32xbf16>
    %c0_17 = arith.constant 0 : index
    %c0_18 = arith.constant 0 : index
    %23 = vector.load %arg8[%c0_17, %c0_18] : memref<32x32xbf16, #tpu.memory_space<vmem>>, vector<32x32xbf16>
    %cst_19 = arith.constant dense<0.000000e+00> : vector<8x32xf32>
    %24 = tpu.matmul %22, %23, %cst_19 {dimension_numbers = #tpu.dot_dimension_numbers<[1], [0], [0], [1], [0, 0, 1, 1], [], []>} : vector<8x32xbf16>, vector<32x32xbf16>, vector<8x32xf32> -> vector<8x32xf32>
    %c0_20 = arith.constant 0 : index
    %c0_21 = arith.constant 0 : index
    %25 = vector.load %arg9[%c0_20, %c0_21] : memref<1x32xf32, #tpu.memory_space<vmem>>, vector<1x32xf32>
    %26 = vector.broadcast %25 : vector<1x32xf32> to vector<8x32xf32>
    %27 = arith.addf %24, %26 : vector<8x32xf32>
    %cst_22 = arith.constant 0.000000e+00 : f32
    %28 = vector.broadcast %cst_22 : f32 to vector<8x32xf32>
    %29 = arith.maximumf %27, %28 : vector<8x32xf32>
    %30 = arith.truncf %29 : vector<8x32xf32> to vector<8x32xbf16>
    %c0_23 = arith.constant 0 : index
    %c0_24 = arith.constant 0 : index
    %31 = vector.load %arg10[%c0_23, %c0_24] : memref<32x128xbf16, #tpu.memory_space<vmem>>, vector<32x128xbf16>
    %cst_25 = arith.constant dense<0.000000e+00> : vector<8x128xf32>
    %32 = tpu.matmul %30, %31, %cst_25 {dimension_numbers = #tpu.dot_dimension_numbers<[1], [0], [0], [1], [0, 0, 1, 1], [], []>} : vector<8x32xbf16>, vector<32x128xbf16>, vector<8x128xf32> -> vector<8x128xf32>
    %c0_26 = arith.constant 0 : index
    %c0_27 = arith.constant 0 : index
    %33 = vector.load %arg11[%c0_26, %c0_27] : memref<1x128xf32, #tpu.memory_space<vmem>>, vector<1x128xf32>
    %34 = vector.broadcast %33 : vector<1x128xf32> to vector<8x128xf32>
    %35 = arith.addf %32, %34 : vector<8x128xf32>
    %36 = math.tanh %35 : vector<8x128xf32>
    %cst_28 = arith.constant 1.000000e+00 : f32
    %37 = vector.broadcast %cst_28 : f32 to vector<8x128xf32>
    %38 = arith.mulf %37, %36 : vector<8x128xf32>
    %c0_29 = arith.constant 0 : index
    %c0_30 = arith.constant 0 : index
    %39 = vector.load %arg12[%c0_29, %c0_30] : memref<8x128xf32, #tpu.memory_space<vmem>>, vector<8x128xf32>
    tpu.vector_store %arg12[%c0_29, %c0_30], %38 {strides = array<i32>} : memref<8x128xf32, #tpu.memory_space<vmem>>, vector<8x128xf32>,
    return
  }
  func.func @transform_0(%arg0: i32) -> (i32, i32) {
    %c0_i32 = arith.constant 0 : i32
    %c0_i32_0 = arith.constant 0 : i32
    return %arg0, %c0_i32 : i32, i32
  }
  func.func @transform_1(%arg0: i32) -> (i32, i32) {
    %c0_i32 = arith.constant 0 : i32
    %c0_i32_0 = arith.constant 0 : i32
    return %arg0, %c0_i32 : i32, i32
  }
  func.func @transform_2(%arg0: i32) -> (i32, i32) {
    %c0_i32 = arith.constant 0 : i32
    %c0_i32_0 = arith.constant 0 : i32
    %c0_i32_1 = arith.constant 0 : i32
    return %c0_i32, %c0_i32_0 : i32, i32
  }
  func.func @transform_3(%arg0: i32) -> (i32, i32) {
    %c0_i32 = arith.constant 0 : i32
    %c0_i32_0 = arith.constant 0 : i32
    %c0_i32_1 = arith.constant 0 : i32
    return %c0_i32, %c0_i32_0 : i32, i32
  }
  func.func @transform_4(%arg0: i32) -> (i32, i32) {
    %c0_i32 = arith.constant 0 : i32
    %c0_i32_0 = arith.constant 0 : i32
    %c0_i32_1 = arith.constant 0 : i32
    return %c0_i32, %c0_i32_0 : i32, i32
  }
  func.func @transform_5(%arg0: i32) -> (i32, i32) {
    %c0_i32 = arith.constant 0 : i32
    %c0_i32_0 = arith.constant 0 : i32
    %c0_i32_1 = arith.constant 0 : i32
    return %c0_i32, %c0_i32_0 : i32, i32
  }
  func.func @transform_6(%arg0: i32) -> (i32, i32) {
    %c0_i32 = arith.constant 0 : i32
    %c0_i32_0 = arith.constant 0 : i32
    %c0_i32_1 = arith.constant 0 : i32
    return %c0_i32, %c0_i32_0 : i32, i32
  }
  func.func @transform_7(%arg0: i32) -> (i32, i32) {
    %c0_i32 = arith.constant 0 : i32
    %c0_i32_0 = arith.constant 0 : i32
    %c0_i32_1 = arith.constant 0 : i32
    return %c0_i32, %c0_i32_0 : i32, i32
  }
  func.func @transform_8(%arg0: i32) -> (i32, i32) {
    %c0_i32 = arith.constant 0 : i32
    %c0_i32_0 = arith.constant 0 : i32
    %c0_i32_1 = arith.constant 0 : i32
    return %c0_i32, %c0_i32_0 : i32, i32
  }
  func.func @transform_9(%arg0: i32) -> (i32, i32) {
    %c0_i32 = arith.constant 0 : i32
    %c0_i32_0 = arith.constant 0 : i32
    %c0_i32_1 = arith.constant 0 : i32
    return %c0_i32, %c0_i32_0 : i32, i32
  }
  func.func @transform_10(%arg0: i32) -> (i32, i32) {
    %c0_i32 = arith.constant 0 : i32
    %c0_i32_0 = arith.constant 0 : i32
    %c0_i32_1 = arith.constant 0 : i32
    return %c0_i32, %c0_i32_0 : i32, i32
  }
  func.func @transform_11(%arg0: i32) -> (i32, i32) {
    %c0_i32 = arith.constant 0 : i32
    %c0_i32_0 = arith.constant 0 : i32
    return %arg0, %c0_i32 : i32, i32
  }
}

</mosaic_0001>

<llo_original>
// kernel: tpu_custom_call.1
$region0: #{tpu_custom_call.1}
  #allocation0 [shape = 'u32[]', space=smem, size = 0x4, offset = 0x4, fixed_abs, tag = 'smem constant byte address 0x4 - core index']
  #allocation1 [shape = 'u32[144,128]{1,0:T(1,128)}', space=vmem, size = 0x12000, scoped, tag = 'internal scratch']
  %s0 = inlined_call_operand.hbm [shape: f32[8,17], index: 0, kind: input, shape index: {}]
  %s1 = inlined_call_operand.hbm [shape: f32[8,6], index: 1, kind: input, shape index: {}]
  %s2 = inlined_call_operand.hbm [shape: bf16[17,32], index: 2, kind: input, shape index: {}]
  %s3 = inlined_call_operand.hbm [shape: bf16[6,32], index: 3, kind: input, shape index: {}]
  %s4 = inlined_call_operand.vmem [shape: f32[1,32], index: 4, kind: input, shape index: {}]
  %s5 = inlined_call_operand.vmem [shape: bf16[32,32], index: 5, kind: input, shape index: {}]
  %s6 = inlined_call_operand.vmem [shape: f32[1,32], index: 6, kind: input, shape index: {}]
  %s7 = inlined_call_operand.hbm [shape: bf16[32,32], index: 7, kind: input, shape index: {}]
  %s8 = inlined_call_operand.hbm [shape: f32[1,32], index: 8, kind: input, shape index: {}]
  %s9 = inlined_call_operand.vmem [shape: bf16[32,128], index: 9, kind: input, shape index: {}]
  %s10 = inlined_call_operand.vmem [shape: f32[1,128], index: 10, kind: input, shape index: {}]
  %s11 = inlined_call_operand.hbm [shape: f32[8,128], index: 11, kind: output, shape index: {}]
  %s12 = sld [smem:[#allocation0]]
  $region78: #{tpu_custom_call.1} parent=0
    _
  %s14 = ssub.s32 1, %s12
  %s15 = scalar_select 0, %s14, %s12
  $region1: #{tpu_custom_call.1} parent=0
    #allocation2 [shape = 'u8[4096]{0}', space=vmem, size = 0x1000, scoped, tag = 'input window, operand 0, single buffered']
    #allocation3 [shape = 's32[1]{0}', space=sflag, size = 0x4, scoped, tag = 'scoped memory for tpu_custom_call.1']
    #allocation4 [shape = 's32[1]{0}', space=sflag, size = 0x4, scoped, tag = 'scoped memory for tpu_custom_call.1']
    #allocation5 [shape = 'u8[4096]{0}', space=vmem, size = 0x1000, scoped, tag = 'input window, operand 1, single buffered']
    #allocation6 [shape = 's32[1]{0}', space=sflag, size = 0x4, scoped, tag = 'scoped memory for tpu_custom_call.1']
    #allocation7 [shape = 'u8[6144]{0}', space=vmem, size = 0x1800, scoped, tag = 'input window, operand 2, single buffered']
    #allocation8 [shape = 'u8[2048]{0}', space=vmem, size = 0x800, scoped, tag = 'input window, operand 3, single buffered']
    #allocation9 [shape = 's32[1]{0}', space=sflag, size = 0x4, scoped, tag = 'scoped memory for tpu_custom_call.1']
    #allocation10 [shape = 'u8[8192]{0}', space=vmem, size = 0x2000, scoped, tag = 'input window, operand 7, single buffered']
    #allocation11 [shape = 'u8[512]{0}', space=vmem, size = 0x400, scoped, tag = 'input window, operand 8, single buffered']
    #allocation12 [shape = 's32[1]{0}', space=sflag, size = 0x4, scoped, tag = 'scoped memory for tpu_custom_call.1']
    #allocation13 [shape = 'u8[4096]{0}', space=vmem, size = 0x1000, scoped, tag = 'output window, operand 0, single buffered']
    %16 = vsyncpa [#allocation3], 0
    %17 = vsyncpa [#allocation6], 0
    %18 = vsyncpa [#allocation9], 0
    %19 = vsyncpa [#allocation12], 0
    %20 = vsyncpa [#allocation4], 0
    // Predicated region
    $region2: #{tpu_custom_call.1} parent=1 // pred_check
      _
    $region3: #{tpu_custom_call.1} parent=1 // pred_check_branch
      %22 = sbr.rel (0) target = $region5
    $region4: #{tpu_custom_call.1} parent=1 // pred_region
      %s24 = ssub.s32 128, 128
      %25 = vsyncadd [#allocation3], %s24
      %s27 = sshll.u32 [#allocation2], 4
      %s28 = int_to_ptr.vmem [resolvable:$true] %s27
      %30 = dma.hbm_to_vmem [thread:$0]  %s0, 128, %s28, [#allocation3]
    $region5: #{tpu_custom_call.1} parent=1 // pred_fallthru
      _
    // Predicated region
    $region6: #{tpu_custom_call.1} parent=1 // pred_check
      _
    $region7: #{tpu_custom_call.1} parent=1 // pred_check_branch
      %32 = sbr.rel (0) target = $region9
    $region8: #{tpu_custom_call.1} parent=1 // pred_region
      %s34 = ssub.s32 128, 128
      %35 = vsyncadd [#allocation6], %s34
      %s37 = sshll.u32 [#allocation5], 4
      %s38 = int_to_ptr.vmem [resolvable:$true] %s37
      %40 = dma.hbm_to_vmem [thread:$0]  %s1, 128, %s38, [#allocation6]
    $region9: #{tpu_custom_call.1} parent=1 // pred_fallthru
      _
    // Predicated region
    $region10: #{tpu_custom_call.1} parent=1 // pred_check
      _
    $region11: #{tpu_custom_call.1} parent=1 // pred_check_branch
      %42 = sbr.rel (0) target = $region13
    $region12: #{tpu_custom_call.1} parent=1 // pred_region
      %s44 = ssub.s32 192, 192
      %45 = vsyncadd [#allocation6], %s44
      %s46 = sshll.u32 [#allocation7], 4
      %s47 = int_to_ptr.vmem [resolvable:$true] %s46
      %52 = dma.hbm_to_vmem [thread:$0]  %s2, 192, %s47, [#allocation6], 64, 64, 4
    $region13: #{tpu_custom_call.1} parent=1 // pred_fallthru
      _
    // Predicated region
    $region14: #{tpu_custom_call.1} parent=1 // pred_check
      _
    $region15: #{tpu_custom_call.1} parent=1 // pred_check_branch
      %54 = sbr.rel (0) target = $region17
    $region16: #{tpu_custom_call.1} parent=1 // pred_region
      %s56 = ssub.s32 64, 64
      %57 = vsyncadd [#allocation9], %s56
      %s59 = sshll.u32 [#allocation8], 4
      %s60 = int_to_ptr.vmem [resolvable:$true] %s59
      %62 = dma.hbm_to_vmem [thread:$0]  %s3, 64, %s60, [#allocation9]
    $region17: #{tpu_custom_call.1} parent=1 // pred_fallthru
      _
    // Predicated region
    $region18: #{tpu_custom_call.1} parent=1 // pred_check
      _
    $region19: #{tpu_custom_call.1} parent=1 // pred_check_branch
      %64 = sbr.rel (0) target = $region21
    $region20: #{tpu_custom_call.1} parent=1 // pred_region
      _
    $region21: #{tpu_custom_call.1} parent=1 // pred_fallthru
      _
    // Predicated region
    $region22: #{tpu_custom_call.1} parent=1 // pred_check
      _
    $region23: #{tpu_custom_call.1} parent=1 // pred_check_branch
      %66 = sbr.rel (0) target = $region25
    $region24: #{tpu_custom_call.1} parent=1 // pred_region
      _
    $region25: #{tpu_custom_call.1} parent=1 // pred_fallthru
      _
    // Predicated region
    $region26: #{tpu_custom_call.1} parent=1 // pred_check
      _
    $region27: #{tpu_custom_call.1} parent=1 // pred_check_branch
      %68 = sbr.rel (0) target = $region29
    $region28: #{tpu_custom_call.1} parent=1 // pred_region
      _
    $region29: #{tpu_custom_call.1} parent=1 // pred_fallthru
      _
    // Predicated region
    $region30: #{tpu_custom_call.1} parent=1 // pred_check
      _
    $region31: #{tpu_custom_call.1} parent=1 // pred_check_branch
      %70 = sbr.rel (0) target = $region33
    $region32: #{tpu_custom_call.1} parent=1 // pred_region
      %s72 = ssub.s32 256, 256
      %73 = vsyncadd [#allocation9], %s72
      %s74 = sshll.u32 [#allocation10], 4
      %s75 = int_to_ptr.vmem [resolvable:$true] %s74
      %80 = dma.hbm_to_vmem [thread:$0]  %s7, 256, %s75, [#allocation9], 64, 64, 4
    $region33: #{tpu_custom_call.1} parent=1 // pred_fallthru
      _
    // Predicated region
    $region34: #{tpu_custom_call.1} parent=1 // pred_check
      _
    $region35: #{tpu_custom_call.1} parent=1 // pred_check_branch
      %82 = sbr.rel (0) target = $region37
    $region36: #{tpu_custom_call.1} parent=1 // pred_region
      %s84 = ssub.s32 16, 16
      %85 = vsyncadd [#allocation12], %s84
      %s87 = sshll.u32 [#allocation11], 4
      %s88 = int_to_ptr.vmem [resolvable:$true] %s87
      %90 = dma.hbm_to_vmem [thread:$0]  %s8, 16, %s88, [#allocation12]
    $region37: #{tpu_custom_call.1} parent=1 // pred_fallthru
      _
    // Predicated region
    $region38: #{tpu_custom_call.1} parent=1 // pred_check
      _
    $region39: #{tpu_custom_call.1} parent=1 // pred_check_branch
      %92 = sbr.rel (0) target = $region41
    $region40: #{tpu_custom_call.1} parent=1 // pred_region
      _
    $region41: #{tpu_custom_call.1} parent=1 // pred_fallthru
      _
    // Predicated region
    $region42: #{tpu_custom_call.1} parent=1 // pred_check
      _
    $region43: #{tpu_custom_call.1} parent=1 // pred_check_branch
      %94 = sbr.rel (0) target = $region45
    $region44: #{tpu_custom_call.1} parent=1 // pred_region
      _
    $region45: #{tpu_custom_call.1} parent=1 // pred_fallthru
      _
    // Predicated region
    $region46: #{tpu_custom_call.1} parent=1 // pred_check
      _
    $region47: #{tpu_custom_call.1} parent=1 // pred_check_branch
      %96 = sbr.rel (0) target = $region49
    $region48: #{tpu_custom_call.1} parent=1 // pred_region
      %97 = dma.done [#allocation3], 128
    $region49: #{tpu_custom_call.1} parent=1 // pred_fallthru
      _
    // Predicated region
    $region50: #{tpu_custom_call.1} parent=1 // pred_check
      _
    $region51: #{tpu_custom_call.1} parent=1 // pred_check_branch
      %99 = sbr.rel (0) target = $region53
    $region52: #{tpu_custom_call.1} parent=1 // pred_region
      %100 = dma.done [#allocation6], 128
    $region53: #{tpu_custom_call.1} parent=1 // pred_fallthru
      _
    // Predicated region
    $region54: #{tpu_custom_call.1} parent=1 // pred_check
      _
    $region55: #{tpu_custom_call.1} parent=1 // pred_check_branch
      %102 = sbr.rel (0) target = $region57
    $region56: #{tpu_custom_call.1} parent=1 // pred_region
      %103 = dma.done [#allocation6], 192
    $region57: #{tpu_custom_call.1} parent=1 // pred_fallthru
      _
    // Predicated region
    $region58: #{tpu_custom_call.1} parent=1 // pred_check
      _
    $region59: #{tpu_custom_call.1} parent=1 // pred_check_branch
      %105 = sbr.rel (0) target = $region61
    $region60: #{tpu_custom_call.1} parent=1 // pred_region
      %106 = dma.done [#allocation9], 64
    $region61: #{tpu_custom_call.1} parent=1 // pred_fallthru
      _
    // Predicated region
    $region62: #{tpu_custom_call.1} parent=1 // pred_check
      _
    $region63: #{tpu_custom_call.1} parent=1 // pred_check_branch
      %108 = sbr.rel (0) target = $region65
    $region64: #{tpu_custom_call.1} parent=1 // pred_region
      %109 = dma.done [#allocation9], 256
    $region65: #{tpu_custom_call.1} parent=1 // pred_fallthru
      _
    // Predicated region
    $region66: #{tpu_custom_call.1} parent=1 // pred_check
      _
    $region67: #{tpu_custom_call.1} parent=1 // pred_check_branch
      %111 = sbr.rel (0) target = $region69
    $region68: #{tpu_custom_call.1} parent=1 // pred_region
      %112 = dma.done [#allocation12], 16
    $region69: #{tpu_custom_call.1} parent=1 // pred_fallthru
      _
    %v114 = vld [vmem:[#allocation2] sm:$0xff]
    %v115 = vpack.c.bf16 %v114, %v114
    %v116 = vld [vmem:[#allocation5] sm:$0xff]
    %v117 = vpack.c.bf16 %v116, %v116
    %v118 = vld [vmem:[#allocation7] sm:$0xf]
    %v119 = vld [vmem:[#allocation7 + $0x4] sm:$0xf]
    %v120 = vld [vmem:[#allocation7 + $0x8] sm:$0x1]
    %v121 = vld [vmem:[#allocation8] sm:$0x7]
    %vm122 = vcmask 48128
    %v124 = vsel %vm122, %v117, 0
    %vm126 = vcmask 1042432
    %v128 = vsel %vm126, %v121, 0
    %130 = vmatprep.subr.bf16.mxu0 0
    %131 = vmatpush1.bf16.msra.mxu0 %v128
    %132 = vmatprep.subr.bf16.mxu0 0
    %133 = vmatpush1.bf16.msra.mxu0 0
    %134 = vmatprep.subr.bf16.mxu0 0
    %135 = vmatpush1.bf16.msra.mxu0 0
    %136 = vmatprep.subr.bf16.mxu0 0
    %137 = vmatpush1.bf16.msra.mxu0 0
    %138 = vmatprep.subr.bf16.mxu0 0
    %139 = vmatpush1.bf16.msra.mxu0 0
    %140 = vmatprep.subr.bf16.mxu0 0
    %141 = vmatpush1.bf16.msra.mxu0 0
    %142 = vmatprep.subr.bf16.mxu0 0
    %143 = vmatpush1.bf16.msra.mxu0 0
    %144 = vmatprep.subr.bf16.mxu0 0
    %145 = vmatpush1.bf16.msra.mxu0 0
    %146 = vmatprep.subr.bf16.mxu0 0
    %147 = vmatpush1.bf16.msra.mxu0 0
    %148 = vmatprep.subr.bf16.mxu0 0
    %149 = vmatpush1.bf16.msra.mxu0 0
    %150 = vmatprep.subr.bf16.mxu0 0
    %151 = vmatpush1.bf16.msra.mxu0 0
    %152 = vmatprep.subr.bf16.mxu0 0
    %153 = vmatpush1.bf16.msra.mxu0 0
    %154 = vmatprep.subr.bf16.mxu0 0
    %155 = vmatpush1.bf16.msra.mxu0 0
    %156 = vmatprep.subr.bf16.mxu0 0
    %157 = vmatpush1.bf16.msra.mxu0 0
    %158 = vmatprep.subr.bf16.mxu0 0
    %159 = vmatpush1.bf16.msra.mxu0 0
    %160 = vmatprep.subr.bf16.mxu0 0
    %161 = vmatpush1.bf16.msra.mxu0 0
    %162 = vmatprep.mubr.bf16.mxu0 0
    %163 = vmatmul.mubr.bf16.gmra.mrb[0].mxu0 %v124
    %v164 = vpop.f32.mrb[0].mxu0
    %v165 = vadd.f32 0.0, %v164
    %v166 = vpop.f32.mrb[0].mxu0
    %v167 = vpop.f32.mrb[0].mxu0
    %v168 = vpop.f32.mrb[0].mxu0
    %169 = vdwg.mxu0
    %v173 = vunpack.c.l.b16 %v118
    %v174 = vunpack.c.l.b16 %v119
    %v175 = vunpack.c.l.b16 %v120
    %v176 = vpack.c.b16 %v174, %v173
    %v177 = vpack.c.b16 %v175, %v175
    %vm179 = vcmask 138240
    %v181 = vsel %vm179, %v115, 0
    %vm183 = vcmask 1040384
    %v184 = vsel 0, 4294967295, 65535
    %v185 = vsel %vm183, %v184, 0
    %v187 = vand.u32 %v177, %v185
    %189 = vmatprep.subr.bf16.mxu0 0
    %190 = vmatpush1.bf16.msra.mxu0 %v176
    %191 = vmatprep.subr.bf16.mxu0 0
    %192 = vmatpush1.bf16.msra.mxu0 %v187
    %193 = vmatprep.subr.bf16.mxu0 0
    %194 = vmatpush1.bf16.msra.mxu0 0
    %195 = vmatprep.subr.bf16.mxu0 0
    %196 = vmatpush1.bf16.msra.mxu0 0
    %197 = vmatprep.subr.bf16.mxu0 0
    %198 = vmatpush1.bf16.msra.mxu0 0
    %199 = vmatprep.subr.bf16.mxu0 0
    %200 = vmatpush1.bf16.msra.mxu0 0
    %201 = vmatprep.subr.bf16.mxu0 0
    %202 = vmatpush1.bf16.msra.mxu0 0
    %203 = vmatprep.subr.bf16.mxu0 0
    %204 = vmatpush1.bf16.msra.mxu0 0
    %205 = vmatprep.subr.bf16.mxu0 0
    %206 = vmatpush1.bf16.msra.mxu0 0
    %207 = vmatprep.subr.bf16.mxu0 0
    %208 = vmatpush1.bf16.msra.mxu0 0
    %209 = vmatprep.subr.bf16.mxu0 0
    %210 = vmatpush1.bf16.msra.mxu0 0
    %211 = vmatprep.subr.bf16.mxu0 0
    %212 = vmatpush1.bf16.msra.mxu0 0
    %213 = vmatprep.subr.bf16.mxu0 0
    %214 = vmatpush1.bf16.msra.mxu0 0
    %215 = vmatprep.subr.bf16.mxu0 0
    %216 = vmatpush1.bf16.msra.mxu0 0
    %217 = vmatprep.subr.bf16.mxu0 0
    %218 = vmatpush1.bf16.msra.mxu0 0
    %219 = vmatprep.subr.bf16.mxu0 0
    %220 = vmatpush1.bf16.msra.mxu0 0
    %221 = vmatprep.mubr.bf16.mxu0 0
    %222 = vmatmul.mubr.bf16.gmra.mrb[0].mxu0 %v181
    %v223 = vpop.f32.mrb[0].mxu0
    %v224 = vadd.f32 %v165, %v223
    %v225 = vpop.f32.mrb[0].mxu0
    %v226 = vpop.f32.mrb[0].mxu0
    %v227 = vpop.f32.mrb[0].mxu0
    %228 = vdwg.mxu0
    %v229 = vld [vmem:[%s4] sm:$0x1]
    %v231 = vlaneseq
    %v232 = vshrl.u32 %v231, 7
    %v233 = vsub.s32 0, %v232
    %v234 = vrot.slane %v229, %v233
    %v236 = vadd.f32 %v224, %v234
    %v237 = vmax.f32 %v236, 0.0
    %v238 = vpack.c.bf16 %v237, %v237
    %v239 = vld [vmem:[%s5] sm:$0xf]
    %v240 = vld [vmem:[%s5 + $0x4] sm:$0xf]
    %v241 = vld [vmem:[%s5 + $0x8] sm:$0xf]
    %v242 = vld [vmem:[%s5 + $0xc] sm:$0xf]
    %v243 = vld [vmem:[%s6] sm:$0x1]
    %v245 = vlaneseq
    %v246 = vshrl.u32 %v245, 7
    %v247 = vsub.s32 0, %v246
    %v248 = vrot.slane %v243, %v247
    %v254 = vunpack.c.l.b16 %v239
    %v255 = vunpack.c.l.b16 %v240
    %v256 = vunpack.c.l.b16 %v241
    %v257 = vunpack.c.l.b16 %v242
    %v258 = vpack.c.b16 %v255, %v254
    %v259 = vpack.c.b16 %v257, %v256
    %vm262 = vcmask 261120
    %v264 = vsel %vm262, %v238, 0
    %266 = vmatprep.subr.bf16.mxu0 0
    %267 = vmatpush1.bf16.msra.mxu0 %v258
    %268 = vmatprep.subr.bf16.mxu0 0
    %269 = vmatpush1.bf16.msra.mxu0 %v259
    %270 = vmatprep.subr.bf16.mxu0 0
    %271 = vmatpush1.bf16.msra.mxu0 0
    %272 = vmatprep.subr.bf16.mxu0 0
    %273 = vmatpush1.bf16.msra.mxu0 0
    %274 = vmatprep.subr.bf16.mxu0 0
    %275 = vmatpush1.bf16.msra.mxu0 0
    %276 = vmatprep.subr.bf16.mxu0 0
    %277 = vmatpush1.bf16.msra.mxu0 0
    %278 = vmatprep.subr.bf16.mxu0 0
    %279 = vmatpush1.bf16.msra.mxu0 0
    %280 = vmatprep.subr.bf16.mxu0 0
    %281 = vmatpush1.bf16.msra.mxu0 0
    %282 = vmatprep.subr.bf16.mxu0 0
    %283 = vmatpush1.bf16.msra.mxu0 0
    %284 = vmatprep.subr.bf16.mxu0 0
    %285 = vmatpush1.bf16.msra.mxu0 0
    %286 = vmatprep.subr.bf16.mxu0 0
    %287 = vmatpush1.bf16.msra.mxu0 0
    %288 = vmatprep.subr.bf16.mxu0 0
    %289 = vmatpush1.bf16.msra.mxu0 0
    %290 = vmatprep.subr.bf16.mxu0 0
    %291 = vmatpush1.bf16.msra.mxu0 0
    %292 = vmatprep.subr.bf16.mxu0 0
    %293 = vmatpush1.bf16.msra.mxu0 0
    %294 = vmatprep.subr.bf16.mxu0 0
    %295 = vmatpush1.bf16.msra.mxu0 0
    %296 = vmatprep.subr.bf16.mxu0 0
    %297 = vmatpush1.bf16.msra.mxu0 0
    %298 = vmatprep.mubr.bf16.mxu0 0
    %299 = vmatmul.mubr.bf16.gmra.mrb[0].mxu0 %v264
    %v300 = vpop.f32.mrb[0].mxu0
    %v301 = vadd.f32 %v248, %v300
    %v302 = vpop.f32.mrb[0].mxu0
    %v303 = vpop.f32.mrb[0].mxu0
    %v304 = vpop.f32.mrb[0].mxu0
    %305 = vdwg.mxu0
    %v306 = vmax.f32 %v301, 0.0
    %v307 = vpack.c.bf16 %v306, %v306
    %v308 = vld [vmem:[#allocation10] sm:$0xf]
    %v309 = vld [vmem:[#allocation10 + $0x4] sm:$0xf]
    %v310 = vld [vmem:[#allocation10 + $0x8] sm:$0xf]
    %v311 = vld [vmem:[#allocation10 + $0xc] sm:$0xf]
    %v312 = vld [vmem:[#allocation11] sm:$0x1]
    %v314 = vlaneseq
    %v315 = vshrl.u32 %v314, 7
    %v316 = vsub.s32 0, %v315
    %v317 = vrot.slane %v312, %v316
    %v323 = vunpack.c.l.b16 %v308
    %v324 = vunpack.c.l.b16 %v309
    %v325 = vunpack.c.l.b16 %v310
    %v326 = vunpack.c.l.b16 %v311
    %v327 = vpack.c.b16 %v324, %v323
    %v328 = vpack.c.b16 %v326, %v325
    %v332 = vsel %vm262, %v307, 0
    %334 = vmatprep.subr.bf16.mxu0 0
    %335 = vmatpush1.bf16.msra.mxu0 %v327
    %336 = vmatprep.subr.bf16.mxu0 0
    %337 = vmatpush1.bf16.msra.mxu0 %v328
    %338 = vmatprep.subr.bf16.mxu0 0
    %339 = vmatpush1.bf16.msra.mxu0 0
    %340 = vmatprep.subr.bf16.mxu0 0
    %341 = vmatpush1.bf16.msra.mxu0 0
    %342 = vmatprep.subr.bf16.mxu0 0
    %343 = vmatpush1.bf16.msra.mxu0 0
    %344 = vmatprep.subr.bf16.mxu0 0
    %345 = vmatpush1.bf16.msra.mxu0 0
    %346 = vmatprep.subr.bf16.mxu0 0
    %347 = vmatpush1.bf16.msra.mxu0 0
    %348 = vmatprep.subr.bf16.mxu0 0
    %349 = vmatpush1.bf16.msra.mxu0 0
    %350 = vmatprep.subr.bf16.mxu0 0
    %351 = vmatpush1.bf16.msra.mxu0 0
    %352 = vmatprep.subr.bf16.mxu0 0
    %353 = vmatpush1.bf16.msra.mxu0 0
    %354 = vmatprep.subr.bf16.mxu0 0
    %355 = vmatpush1.bf16.msra.mxu0 0
    %356 = vmatprep.subr.bf16.mxu0 0
    %357 = vmatpush1.bf16.msra.mxu0 0
    %358 = vmatprep.subr.bf16.mxu0 0
    %359 = vmatpush1.bf16.msra.mxu0 0
    %360 = vmatprep.subr.bf16.mxu0 0
    %361 = vmatpush1.bf16.msra.mxu0 0
    %362 = vmatprep.subr.bf16.mxu0 0
    %363 = vmatpush1.bf16.msra.mxu0 0
    %364 = vmatprep.subr.bf16.mxu0 0
    %365 = vmatpush1.bf16.msra.mxu0 0
    %366 = vmatprep.mubr.bf16.mxu0 0
    %367 = vmatmul.mubr.bf16.gmra.mrb[0].mxu0 %v332
    %v368 = vpop.f32.mrb[0].mxu0
    %v369 = vadd.f32 %v317, %v368
    %v370 = vpop.f32.mrb[0].mxu0
    %v371 = vpop.f32.mrb[0].mxu0
    %v372 = vpop.f32.mrb[0].mxu0
    %373 = vdwg.mxu0
    %v374 = vmax.f32 %v369, 0.0
    %v375 = vpack.c.bf16 %v374, %v374
    %v376 = vld [vmem:[%s9] sm:$0xf]
    %v377 = vld [vmem:[%s9 + $0x4] sm:$0xf]
    %v378 = vld [vmem:[%s9 + $0x8] sm:$0xf]
    %v379 = vld [vmem:[%s9 + $0xc] sm:$0xf]
    %v380 = vld [vmem:[%s10] sm:$0x1]
    %v382 = vlaneseq
    %v383 = vshrl.u32 %v382, 7
    %v384 = vsub.s32 0, %v383
    %v385 = vrot.slane %v380, %v384
    %v391 = vunpack.c.l.b16 %v376
    %v392 = vunpack.c.l.b16 %v377
    %v393 = vunpack.c.l.b16 %v378
    %v394 = vunpack.c.l.b16 %v379
    %v395 = vpack.c.b16 %v392, %v391
    %v396 = vpack.c.b16 %v394, %v393
    %v400 = vsel %vm262, %v375, 0
    %402 = vmatprep.subr.bf16.mxu0 0
    %403 = vmatpush1.bf16.msra.mxu0 %v395
    %404 = vmatprep.subr.bf16.mxu0 0
    %405 = vmatpush1.bf16.msra.mxu0 %v396
    %406 = vmatprep.subr.bf16.mxu0 0
    %407 = vmatpush1.bf16.msra.mxu0 0
    %408 = vmatprep.subr.bf16.mxu0 0
    %409 = vmatpush1.bf16.msra.mxu0 0
    %410 = vmatprep.subr.bf16.mxu0 0
    %411 = vmatpush1.bf16.msra.mxu0 0
    %412 = vmatprep.subr.bf16.mxu0 0
    %413 = vmatpush1.bf16.msra.mxu0 0
    %414 = vmatprep.subr.bf16.mxu0 0
    %415 = vmatpush1.bf16.msra.mxu0 0
    %416 = vmatprep.subr.bf16.mxu0 0
    %417 = vmatpush1.bf16.msra.mxu0 0
    %418 = vmatprep.subr.bf16.mxu0 0
    %419 = vmatpush1.bf16.msra.mxu0 0
    %420 = vmatprep.subr.bf16.mxu0 0
    %421 = vmatpush1.bf16.msra.mxu0 0
    %422 = vmatprep.subr.bf16.mxu0 0
    %423 = vmatpush1.bf16.msra.mxu0 0
    %424 = vmatprep.subr.bf16.mxu0 0
    %425 = vmatpush1.bf16.msra.mxu0 0
    %426 = vmatprep.subr.bf16.mxu0 0
    %427 = vmatpush1.bf16.msra.mxu0 0
    %428 = vmatprep.subr.bf16.mxu0 0
    %429 = vmatpush1.bf16.msra.mxu0 0
    %430 = vmatprep.subr.bf16.mxu0 0
    %431 = vmatpush1.bf16.msra.mxu0 0
    %432 = vmatprep.subr.bf16.mxu0 0
    %433 = vmatpush1.bf16.msra.mxu0 0
    %434 = vmatprep.mubr.bf16.mxu0 0
    %435 = vmatmul.mubr.bf16.gmra.mrb[0].mxu0 %v400
    %v436 = vpop.f32.mrb[0].mxu0
    %v437 = vadd.f32 %v385, %v436
    %v438 = vpop.f32.mrb[0].mxu0
    %v439 = vpop.f32.mrb[0].mxu0
    %v440 = vpop.f32.mrb[0].mxu0
    %441 = vdwg.mxu0
    %v442 = vtanh.pop %v437
    %443 = vst [vmem:[#allocation13] sm:$0xff] %v442
    // Predicated region
    $region70: #{tpu_custom_call.1} parent=1 // pred_check
      _
    $region71: #{tpu_custom_call.1} parent=1 // pred_check_branch
      %445 = sbr.rel (0) target = $region73
    $region72: #{tpu_custom_call.1} parent=1 // pred_region
      %s447 = ssub.s32 128, 128
      %448 = vsyncadd [#allocation4], %s447
      %s450 = sshll.u32 [#allocation13], 4
      %s451 = int_to_ptr.vmem [resolvable:$true] %s450
      %453 = dma.vmem_to_hbm [thread:$0]  %s451, 128, %s11, [#allocation4]
    $region73: #{tpu_custom_call.1} parent=1 // pred_fallthru
      _
    // Predicated region
    $region74: #{tpu_custom_call.1} parent=1 // pred_check
      _
    $region75: #{tpu_custom_call.1} parent=1 // pred_check_branch
      %455 = sbr.rel (0) target = $region77
    $region76: #{tpu_custom_call.1} parent=1 // pred_region
      %456 = dma.done [#allocation4], 128
    $region77: #{tpu_custom_call.1} parent=1 // pred_fallthru
      _
    %457 = vsyncpa [#allocation3], 1
    %458 = vsyncpa [#allocation6], 1
    %459 = vsyncpa [#allocation9], 1
    %460 = vsyncpa [#allocation12], 1
    %461 = vsyncpa [#allocation4], 1

</llo_original>
